<compile_context>
chip_gen: v7x
topology: tpu7x:2x2x1
jax: 0.10.0
libtpu: 0.0.40
codegen_flags: <defaults>
</compile_context>

<pallas_src>
import jax
import jax.numpy as jnp
from jax import lax
from jax.experimental import pallas as pl
from jax.experimental.pallas import tpu as pltpu


def _tied_spline_kernel(x_ref, w_ref, o_ref):
    # x_ref: (tn, K)      VMEM   (K = in_features * (degree+1))
    # w_ref: (K, out_f)   VMEM   (spline weight already fused into the conv weight)
    # o_ref: (tn, out_f)  VMEM
    o_ref[...] = jnp.dot(
        x_ref[...], w_ref[...], preferred_element_type=jnp.float32
    ).astype(o_ref.dtype)


def _round_up(v, m):
    return ((v + m - 1) // m) * m


def _tensorcores_per_chip():
    # Best-effort detection: only v7x has 2 TensorCores per chip.  Default to 1 (no split).
    try:
        kind = jax.devices()[0].device_kind.lower()
        if "v7" in kind:
            return 2
    except Exception:
        pass
    return 1


def tied_spline_linear(x, conv_weight, spline_weight, *,
                       force_pallas=False,
                       small_n_threshold=512,
                       max_rows_per_tile=None,
                       compute_dtype=None):
    """Forward of tied_SplineLinear.

    x:             (B, C1, in_features, degree+1) or (B, in_features, degree+1)
    conv_weight:   (out_features, in_features)    (Conv1d k=1 weight, squeezed)
    spline_weight: (out_features, degree+1)

    force_pallas:      run the Pallas kernel even below the small-N threshold (for testing).
    max_rows_per_tile: optional cap on the row tile (testing multi-step / ragged grids).
    compute_dtype:     optional narrower input dtype (e.g. jnp.bfloat16); accumulation stays f32.
    """
    og_shape = x.shape
    if x.ndim == 4:
        b, c1, in_f, dp1 = og_shape
        n = b * c1
    elif x.ndim == 3:
        b, in_f, dp1 = og_shape
        n = b
    else:
        raise ValueError(f"expected 3D or 4D input, got {og_shape}")

    out_f = conv_weight.shape[0]
    k = in_f * dp1
    out_dtype = x.dtype

    # Contiguous (free) flatten: x_flat[n, i*dp1 + l] = x[n, i, l].
    x_flat = x.reshape(n, k)

    # Fuse spline weight into the conv weight:
    #   W_eff[i*dp1 + l, o] = conv_weight[o, i] * spline_weight[o, l]
    w_eff = conv_weight[:, :, None] * spline_weight[:, None, :]     # (out_f, in_f, dp1)
    w_eff = jnp.transpose(w_eff, (1, 2, 0)).reshape(k, out_f)       # (in_f*dp1, out_f)

    if compute_dtype is not None:
        x_flat = x_flat.astype(compute_dtype)
        w_eff = w_eff.astype(compute_dtype)

    # ---- Small-N fast path: pallas_call fixed cost dwarfs the work below ~a few hundred rows.
    if (not force_pallas) and n < small_n_threshold:
        out = jnp.dot(x_flat, w_eff,
                      preferred_element_type=jnp.float32).astype(out_dtype)
    else:
        # ---- Row-tile selection ------------------------------------------------------------
        # Double-buffered x tile + out tile must stay well under the smallest scoped-VMEM
        # default (v5e: 16 MiB).  The resident weight tile (k*out_f) is tiny at these shapes.
        in_bytes = jnp.dtype(x_flat.dtype).itemsize
        out_bytes = jnp.dtype(out_dtype).itemsize
        row_bytes = k * in_bytes + out_f * out_bytes
        budget = 8 * 1024 * 1024                       # conservative working-set cap
        tn = max(8, (budget // (2 * row_bytes)) // 8 * 8)
        tn = min(tn, 4096)                             # big enough to amortize per-step cost
        if max_rows_per_tile is not None:
            tn = min(tn, max(8, (max_rows_per_tile // 8) * 8))
        tn = min(tn, _round_up(n, 8))                  # never larger than (sublane-rounded) N

        # v7x megacore: guarantee >=2 grid steps (one per TensorCore) only when each half is
        # still >= ~1024 rows; single-TC chips (v5e/v6e) keep the largest tile / fewest steps.
        if _tensorcores_per_chip() >= 2 and n >= 2048 and pl.cdiv(n, tn) < 2:
            tn = min(tn, _round_up(pl.cdiv(n, 2), 8))

        grid = (pl.cdiv(n, tn),)                       # ragged last block handled by Pallas

        out = pl.pallas_call(
            _tied_spline_kernel,
            out_shape=jax.ShapeDtypeStruct((n, out_f), out_dtype),
            grid_spec=pltpu.PrefetchScalarGridSpec(
                num_scalar_prefetch=0,
                grid=grid,
                in_specs=[
                    pl.BlockSpec((tn, k), lambda i: (i, 0)),
                    pl.BlockSpec((k, out_f), lambda i: (0, 0)),
                ],
                out_specs=pl.BlockSpec((tn, out_f), lambda i: (i, 0)),
            ),
            compiler_params=pltpu.CompilerParams(
                dimension_semantics=("parallel",)),
        )(x_flat, w_eff)

    if x.ndim == 4:
        return out.reshape(og_shape[0], og_shape[1], out_f)
    return out


def _reference(x, conv_weight, spline_weight):
    """Pure-JAX replica of the PyTorch forward (for correctness check)."""
    og = x.shape
    if len(og) == 4:
        x2 = x.reshape(og[0] * og[1], og[2], og[3])
        y = jnp.einsum('nil,oi->nol', x2, conv_weight,
                       precision=lax.Precision.HIGHEST)
        y = y.reshape(og[0], og[1], -1, og[3])
    else:
        y = jnp.einsum('nil,oi->nol', x, conv_weight,
                       precision=lax.Precision.HIGHEST)
    return (y * spline_weight).sum(-1)


if __name__ == "__main__":
    # Shapes implied by the module: x is (B, C1, in_features, degree+1).
    B, C1 = 2, 8
    in_features, out_features, degree = 32, 16, 3
    init_scale = 0.1

    key = jax.random.PRNGKey(0)
    k_spline, k_conv, k_x = jax.random.split(key, 3)

    # Deterministic synthetic init, matching trunc_normal_(mean=0, std=init_scale):
    #   weight (out_features, degree+1), Conv1d weight (out_features, in_features, 1).
    spline_weight = init_scale * jax.random.truncated_normal(
        k_spline, -2.0, 2.0, (out_features, degree + 1), jnp.float32)
    conv_weight_3d = init_scale * jax.random.truncated_normal(
        k_conv, -2.0, 2.0, (out_features, in_features, 1), jnp.float32)
    conv_weight = conv_weight_3d[:, :, 0]            # (out_features, in_features)

    # --- 4D path (N = B*C1 = 16), Pallas path forced so the kernel itself is exercised. ------
    x = jax.random.normal(k_x, (B, C1, in_features, degree + 1), jnp.float32)
    out = jax.block_until_ready(
        tied_spline_linear(x, conv_weight, spline_weight, force_pallas=True))
    ref = _reference(x, conv_weight, spline_weight)
    assert out.shape == (B, C1, out_features), out.shape
    assert jnp.allclose(out, ref, atol=1e-4, rtol=1e-4), \
        float(jnp.max(jnp.abs(out - ref)))

    # --- 3D path with ragged N (13): single ragged block, masked writeback. -------------------
    x3 = jax.random.normal(jax.random.PRNGKey(1),
                           (13, in_features, degree + 1), jnp.float32)
    out3 = jax.block_until_ready(
        tied_spline_linear(x3, conv_weight, spline_weight, force_pallas=True))
    ref3 = _reference(x3, conv_weight, spline_weight)
    assert out3.shape == (13, out_features), out3.shape
    assert jnp.allclose(out3, ref3, atol=1e-4, rtol=1e-4), \
        float(jnp.max(jnp.abs(out3 - ref3)))

    # --- Multi-step grid with a ragged last block (N = 1037, tile capped at 256 => 5 steps). --
    x4 = jax.random.normal(jax.random.PRNGKey(2),
                           (1037, in_features, degree + 1), jnp.float32)
    out4 = jax.block_until_ready(
        tied_spline_linear(x4, conv_weight, spline_weight,
                           force_pallas=True, max_rows_per_tile=256))
    ref4 = _reference(x4, conv_weight, spline_weight)
    assert out4.shape == (1037, out_features), out4.shape
    assert jnp.allclose(out4, ref4, atol=1e-4, rtol=1e-4), \
        float(jnp.max(jnp.abs(out4 - ref4)))

    print("KERNEL_OK")
</pallas_src>

<mosaic_0001>
module attributes {stable_mosaic.version = 11 : i64} {
  func.func @_tied_spline_kernel(%arg0: i32, %arg1: memref<16x128xf32, #tpu.memory_space<vmem>>, %arg2: memref<128x16xf32, #tpu.memory_space<vmem>>, %arg3: memref<16x16xf32, #tpu.memory_space<vmem>>) attributes {dimension_semantics = [#tpu.dimension_semantics<parallel>], iteration_bounds = array<i64: 1>, scalar_prefetch = 0 : i64, scratch_operands = 0 : i64, tpu.core_type = #tpu.core_type<tc>, window_params = [{transform_indices = @transform_0, window_bounds = array<i64: 16, 128>}, {pipeline_mode = #tpu.pipeline_mode<synchronous>, transform_indices = @transform_1, window_bounds = array<i64: 128, 16>}, {transform_indices = @transform_2, window_bounds = array<i64: 16, 16>}]} {
    %c0 = arith.constant 0 : index
    %c0_0 = arith.constant 0 : index
    %0 = vector.load %arg1[%c0, %c0_0] : memref<16x128xf32, #tpu.memory_space<vmem>>, vector<16x128xf32>
    %c0_1 = arith.constant 0 : index
    %c0_2 = arith.constant 0 : index
    %1 = vector.load %arg2[%c0_1, %c0_2] : memref<128x16xf32, #tpu.memory_space<vmem>>, vector<128x16xf32>
    %cst = arith.constant dense<0.000000e+00> : vector<16x16xf32>
    %2 = tpu.matmul %0, %1, %cst {dimension_numbers = #tpu.dot_dimension_numbers<[1], [0], [0], [1], [0, 0, 1, 1], [], []>} : vector<16x128xf32>, vector<128x16xf32>, vector<16x16xf32> -> vector<16x16xf32>
    %c0_3 = arith.constant 0 : index
    %c0_4 = arith.constant 0 : index
    %3 = vector.load %arg3[%c0_3, %c0_4] : memref<16x16xf32, #tpu.memory_space<vmem>>, vector<16x16xf32>
    tpu.vector_store %arg3[%c0_3, %c0_4], %2 {strides = array<i32>} : memref<16x16xf32, #tpu.memory_space<vmem>>, vector<16x16xf32>,
    return
  }
  func.func @transform_0(%arg0: i32) -> (i32, i32) {
    %c0_i32 = arith.constant 0 : i32
    %c0_i32_0 = arith.constant 0 : i32
    return %arg0, %c0_i32 : i32, i32
  }
  func.func @transform_1(%arg0: i32) -> (i32, i32) {
    %c0_i32 = arith.constant 0 : i32
    %c0_i32_0 = arith.constant 0 : i32
    %c0_i32_1 = arith.constant 0 : i32
    return %c0_i32, %c0_i32_0 : i32, i32
  }
  func.func @transform_2(%arg0: i32) -> (i32, i32) {
    %c0_i32 = arith.constant 0 : i32
    %c0_i32_0 = arith.constant 0 : i32
    return %arg0, %c0_i32 : i32, i32
  }
}

</mosaic_0001>

<llo_original>
// kernel: tpu_custom_call.1
$region0: #{tpu_custom_call.1}
  #allocation0 [shape = 'u32[]', space=smem, size = 0x4, offset = 0x4, fixed_abs, tag = 'smem constant byte address 0x4 - core index']
  #allocation1 [shape = 'u32[144,128]{1,0:T(1,128)}', space=vmem, size = 0x12000, scoped, tag = 'internal scratch']
  %s0 = inlined_call_operand.vmem [shape: f32[16,128], index: 0, kind: input, shape index: {}]
  %s1 = inlined_call_operand.vmem [shape: f32[128,16], index: 1, kind: input, shape index: {}]
  %s2 = inlined_call_operand.hbm [shape: f32[16,16], index: 2, kind: output, shape index: {}]
  %s3 = sld [smem:[#allocation0]]
  $region18: #{tpu_custom_call.1} parent=0
    _
  %s5 = ssub.s32 1, %s3
  %s6 = scalar_select 0, %s5, %s3
  $region1: #{tpu_custom_call.1} parent=0
    #allocation2 [shape = 'u8[8192]{0}', space=vmem, size = 0x2000, scoped, tag = 'output window, operand 0, single buffered']
    #allocation3 [shape = 's32[1]{0}', space=sflag, size = 0x4, scoped, tag = 'scoped memory for tpu_custom_call.1']
    %7 = vsyncpa [#allocation3], 0
    // Predicated region
    $region2: #{tpu_custom_call.1} parent=1 // pred_check
      _
    $region3: #{tpu_custom_call.1} parent=1 // pred_check_branch
      %9 = sbr.rel (0) target = $region5
    $region4: #{tpu_custom_call.1} parent=1 // pred_region
      _
    $region5: #{tpu_custom_call.1} parent=1 // pred_fallthru
      _
    // Predicated region
    $region6: #{tpu_custom_call.1} parent=1 // pred_check
      _
    $region7: #{tpu_custom_call.1} parent=1 // pred_check_branch
      %11 = sbr.rel (0) target = $region9
    $region8: #{tpu_custom_call.1} parent=1 // pred_region
      _
    $region9: #{tpu_custom_call.1} parent=1 // pred_fallthru
      _
    %v12 = vld [vmem:[%s0] sm:$0xff]
    %v13 = vld [vmem:[%s0 + $0x8] sm:$0xff]
    %v14 = vld [vmem:[%s1] sm:$0xff]
    %v15 = vld [vmem:[%s1 + $0x8] sm:$0xff]
    %v16 = vld [vmem:[%s1 + $0x10] sm:$0xff]
    %v17 = vld [vmem:[%s1 + $0x18] sm:$0xff]
    %v18 = vld [vmem:[%s1 + $0x20] sm:$0xff]
    %v19 = vld [vmem:[%s1 + $0x28] sm:$0xff]
    %v20 = vld [vmem:[%s1 + $0x30] sm:$0xff]
    %v21 = vld [vmem:[%s1 + $0x38] sm:$0xff]
    %v22 = vld [vmem:[%s1 + $0x40] sm:$0xff]
    %v23 = vld [vmem:[%s1 + $0x48] sm:$0xff]
    %v24 = vld [vmem:[%s1 + $0x50] sm:$0xff]
    %v25 = vld [vmem:[%s1 + $0x58] sm:$0xff]
    %v26 = vld [vmem:[%s1 + $0x60] sm:$0xff]
    %v27 = vld [vmem:[%s1 + $0x68] sm:$0xff]
    %v28 = vld [vmem:[%s1 + $0x70] sm:$0xff]
    %v29 = vld [vmem:[%s1 + $0x78] sm:$0xff]
    %30 = vmatprep.subr.mxu0 0.0
    %31 = vmatpush1.msra.mxu0 %v14
    %32 = vmatprep.subr.mxu0 0.0
    %33 = vmatpush1.msra.mxu0 %v15
    %34 = vmatprep.subr.mxu0 0.0
    %35 = vmatpush1.msra.mxu0 %v16
    %36 = vmatprep.subr.mxu0 0.0
    %37 = vmatpush1.msra.mxu0 %v17
    %38 = vmatprep.subr.mxu0 0.0
    %39 = vmatpush1.msra.mxu0 %v18
    %40 = vmatprep.subr.mxu0 0.0
    %41 = vmatpush1.msra.mxu0 %v19
    %42 = vmatprep.subr.mxu0 0.0
    %43 = vmatpush1.msra.mxu0 %v20
    %44 = vmatprep.subr.mxu0 0.0
    %45 = vmatpush1.msra.mxu0 %v21
    %46 = vmatprep.subr.mxu0 0.0
    %47 = vmatpush1.msra.mxu0 %v22
    %48 = vmatprep.subr.mxu0 0.0
    %49 = vmatpush1.msra.mxu0 %v23
    %50 = vmatprep.subr.mxu0 0.0
    %51 = vmatpush1.msra.mxu0 %v24
    %52 = vmatprep.subr.mxu0 0.0
    %53 = vmatpush1.msra.mxu0 %v25
    %54 = vmatprep.subr.mxu0 0.0
    %55 = vmatpush1.msra.mxu0 %v26
    %56 = vmatprep.subr.mxu0 0.0
    %57 = vmatpush1.msra.mxu0 %v27
    %58 = vmatprep.subr.mxu0 0.0
    %59 = vmatpush1.msra.mxu0 %v28
    %60 = vmatprep.subr.mxu0 0.0
    %61 = vmatpush1.msra.mxu0 %v29
    %62 = vmatprep.subr.mxu0 0.0
    %63 = vmatpush1.msra.mxu0 0.0
    %64 = vmatprep.subr.mxu0 0.0
    %65 = vmatpush1.msra.mxu0 0.0
    %66 = vmatprep.subr.mxu0 0.0
    %67 = vmatpush1.msra.mxu0 0.0
    %68 = vmatprep.subr.mxu0 0.0
    %69 = vmatpush1.msra.mxu0 0.0
    %70 = vmatprep.subr.mxu0 0.0
    %71 = vmatpush1.msra.mxu0 0.0
    %72 = vmatprep.subr.mxu0 0.0
    %73 = vmatpush1.msra.mxu0 0.0
    %74 = vmatprep.subr.mxu0 0.0
    %75 = vmatpush1.msra.mxu0 0.0
    %76 = vmatprep.subr.mxu0 0.0
    %77 = vmatpush1.msra.mxu0 0.0
    %78 = vmatprep.subr.mxu0 0.0
    %79 = vmatpush1.msra.mxu0 0.0
    %80 = vmatprep.subr.mxu0 0.0
    %81 = vmatpush1.msra.mxu0 0.0
    %82 = vmatprep.subr.mxu0 0.0
    %83 = vmatpush1.msra.mxu0 0.0
    %84 = vmatprep.subr.mxu0 0.0
    %85 = vmatpush1.msra.mxu0 0.0
    %86 = vmatprep.subr.mxu0 0.0
    %87 = vmatpush1.msra.mxu0 0.0
    %88 = vmatprep.subr.mxu0 0.0
    %89 = vmatpush1.msra.mxu0 0.0
    %90 = vmatprep.subr.mxu0 0.0
    %91 = vmatpush1.msra.mxu0 0.0
    %92 = vmatprep.subr.mxu0 0.0
    %93 = vmatpush1.msra.mxu0 0.0
    %94 = vmatprep.mubr.f32.mxu0 0.0
    %95 = vmatmul.mubr.f32.gmra.mrb[0].mxu0 %v12
    %v96 = vpop.f32.mrb[0].mxu0
    %v97 = vadd.f32 0.0, %v96
    %v98 = vpop.f32.mrb[0].mxu0
    %99 = vmatprep.mubr.f32.mxu0 0.0
    %100 = vmatmul.mubr.f32.gmra.mrb[0].mxu0 %v13
    %v101 = vpop.f32.mrb[0].mxu0
    %v102 = vadd.f32 0.0, %v101
    %v103 = vpop.f32.mrb[0].mxu0
    %104 = vdwg.mxu0
    %vm105 = vcmask 130048
    %106 = vst.msk [vmem:[#allocation2] sm:$0xff] %vm105, %v97
    %107 = vst.msk [vmem:[#allocation2 + $0x8] sm:$0xff] %vm105, %v102
    // Predicated region
    $region10: #{tpu_custom_call.1} parent=1 // pred_check
      _
    $region11: #{tpu_custom_call.1} parent=1 // pred_check_branch
      %109 = sbr.rel (0) target = $region13
    $region12: #{tpu_custom_call.1} parent=1 // pred_region
      %s111 = ssub.s32 256, 256
      %112 = vsyncadd [#allocation3], %s111
      %s113 = sshll.u32 [#allocation2], 4
      %s114 = int_to_ptr.vmem [resolvable:$true] %s113
      %119 = dma.vmem_to_hbm [thread:$0]  %s114, 256, %s2, [#allocation3], 128, 128, 8
    $region13: #{tpu_custom_call.1} parent=1 // pred_fallthru
      _
    // Predicated region
    $region14: #{tpu_custom_call.1} parent=1 // pred_check
      _
    $region15: #{tpu_custom_call.1} parent=1 // pred_check_branch
      %121 = sbr.rel (0) target = $region17
    $region16: #{tpu_custom_call.1} parent=1 // pred_region
      %122 = dma.done [#allocation3], 256
    $region17: #{tpu_custom_call.1} parent=1 // pred_fallthru
      _
    %123 = vsyncpa [#allocation3], 1

</llo_original>
